<compile_context>
chip_gen: v6e
topology: v6e:2x2x1
jax: 0.10.0
libtpu: 0.0.40
codegen_flags: <defaults>
</compile_context>

<pallas_src>
import functools

import jax
import jax.numpy as jnp
from jax.experimental import pallas as pl
from jax.experimental.pallas import tpu as pltpu

_LANE = 128


def _round_up(x, m):
    return ((x + m - 1) // m) * m


def _vmem_capacity_bytes():
    """Physical VMEM per TensorCore; conservative fallback if query fails."""
    try:
        return int(pltpu.get_tpu_info().vmem_capacity_bytes)
    except Exception:
        return 64 << 20  # v7x-sized (smallest of the targeted generations)


def _is_v5e():
    try:
        kind = jax.devices()[0].device_kind.lower()
        return ("v5 lite" in kind) or ("v5e" in kind) or ("v5litepod" in kind)
    except Exception:
        return False


def _temperature_kernel(x_ref, w_ref, b_ref, o_ref, *,
                        clamp_min, clamp_max, t, matmul_dtype):
    # x_ref: [TM, H], w_ref: [H, Tp], b_ref: [1, Tp], o_ref: [TM, T]
    logits = jnp.dot(x_ref[...].astype(matmul_dtype),
                     w_ref[...].astype(matmul_dtype),
                     preferred_element_type=jnp.float32)
    logits = logits + b_ref[...].astype(jnp.float32)          # broadcast [1, Tp]
    temps = jnp.clip(jax.nn.sigmoid(logits), clamp_min, clamp_max)
    # Store only the real T head columns (unpadded output slab).
    o_ref[...] = temps[:, :t].astype(o_ref.dtype)


def prepare_temperature_params(weight, bias):
    """Lane-pad the params once (outside the per-call path).

    weight: [H, T] (= torch proj.weight.T), bias: [T]
    Returns (w_padded [H, Tp], b_padded [1, Tp]) with Tp = round_up(T, 128).
    """
    H, T = weight.shape
    Tp = _round_up(T, _LANE)
    w_p = jnp.zeros((H, Tp), weight.dtype).at[:, :T].set(weight)
    b_p = jnp.zeros((1, Tp), bias.dtype).at[0, :T].set(bias)
    return w_p, b_p


def temperature_mechanism(hidden_states, w_padded, b_padded, num_heads,
                          clamp_min=0.01, clamp_max=0.99, block_m=None):
    """hidden_states: [B, S, H]; w_padded: [H, Tp]; b_padded: [1, Tp] -> [B, S, T]."""
    B, S, H = hidden_states.shape
    T = int(num_heads)
    Tp = w_padded.shape[1]
    M = B * S
    dtype = hidden_states.dtype

    x_bytes = jnp.dtype(dtype).itemsize
    w_bytes = jnp.dtype(w_padded.dtype).itemsize
    o_bytes = x_bytes

    # Minimum sublane multiple for the input dtype (f32 -> 8, bf16 -> 16, i8 -> 32).
    sub_m = 8 * max(1, 4 // x_bytes)

    # --- VMEM-budget-derived tile size ------------------------------------
    vmem_cap = _vmem_capacity_bytes()
    vmem_budget = max(16 << 20, vmem_cap - (16 << 20))        # leave headroom

    resident = (H + 1) * Tp * w_bytes                          # single-buffered w + b
    per_row = 2 * (H * x_bytes + _LANE * o_bytes)              # 2x-buffered x + out tiles
    if block_m is None:
        block_m = (vmem_budget - resident) // max(per_row, 1)
        block_m = min(block_m, 1024)                           # amortize ~0.35us/step
    block_m = max(sub_m, (int(block_m) // sub_m) * sub_m)
    TM = min(block_m, _round_up(M, sub_m))

    grid = (pl.cdiv(M, TM),)                                   # ragged last tile OK

    # bf16 matmul on v5e only (padded f32 matmul is near the v5e f32-MXU roofline);
    # keep input dtype elsewhere (HBM-bound either way on v6e/v7x).
    matmul_dtype = jnp.bfloat16 if (_is_v5e() and dtype == jnp.float32) else dtype

    x2d = hidden_states.reshape(M, H)

    kernel = functools.partial(
        _temperature_kernel, clamp_min=clamp_min, clamp_max=clamp_max,
        t=T, matmul_dtype=matmul_dtype)

    cost = pl.CostEstimate(
        flops=2 * M * H * Tp,
        transcendentals=M * Tp,
        bytes_accessed=M * H * x_bytes + H * Tp * w_bytes + M * T * o_bytes,
    )

    # Request enough scoped VMEM for the actual working set, but never more
    # than physical capacity minus headroom (v7x is only 64 MiB).
    vmem_needed = TM * per_row + resident
    vmem_limit = int(min(vmem_cap - (8 << 20),
                         max(32 << 20, int(1.25 * vmem_needed))))

    out2d = pl.pallas_call(
        kernel,
        out_shape=jax.ShapeDtypeStruct((M, T), dtype),
        grid_spec=pltpu.PrefetchScalarGridSpec(
            num_scalar_prefetch=0,
            grid=grid,
            in_specs=[
                pl.BlockSpec((TM, H), lambda i: (i, 0)),                 # streamed x tiles
                pl.BlockSpec((H, Tp), lambda i: (0, 0),
                             pipeline_mode=pl.Buffered(1)),              # resident weight
                pl.BlockSpec((1, Tp), lambda i: (0, 0),
                             pipeline_mode=pl.Buffered(1)),              # resident bias
            ],
            out_specs=pl.BlockSpec((TM, T), lambda i: (i, 0)),           # unpadded T columns
        ),
        compiler_params=pltpu.CompilerParams(
            dimension_semantics=("parallel",),
            vmem_limit_bytes=vmem_limit),
        cost_estimate=cost,
    )(x2d, w_padded, b_padded)

    return out2d.reshape(B, S, T)


def _reference(hidden_states, weight, bias, clamp_min=0.01, clamp_max=0.99):
    logits = jnp.einsum("bsh,ht->bst", hidden_states, weight) + bias
    return jnp.clip(jax.nn.sigmoid(logits), clamp_min, clamp_max)


if __name__ == "__main__":
    # Small shapes consistent with the module: batch=2, seq=8, hidden=32, heads=4
    B, S, H, T = 2, 8, 32, 4

    key = jax.random.PRNGKey(0)
    kx, kw, kb = jax.random.split(key, 3)

    hidden_states = jax.random.normal(kx, (B, S, H), dtype=jnp.float32)

    # Deterministic Linear init (mimic nn.Linear's uniform(-1/sqrt(H), 1/sqrt(H))).
    bound = 1.0 / (H ** 0.5)
    weight = jax.random.uniform(kw, (H, T), minval=-bound, maxval=bound,
                                dtype=jnp.float32)    # stored as [H, T] ( = torch W.T )
    bias = jax.random.uniform(kb, (T,), minval=-bound, maxval=bound,
                              dtype=jnp.float32)

    w_p, b_p = prepare_temperature_params(weight, bias)   # pad once, not per call

    # Tolerance: exact-ish in f32; looser only if the v5e bf16-matmul path is active.
    tol = 2e-2 if _is_v5e() else 1e-5

    # 1) Standard shape.
    out = temperature_mechanism(hidden_states, w_p, b_p, T)
    out = jax.block_until_ready(out)
    ref = _reference(hidden_states, weight, bias)
    assert out.shape == (B, S, T)
    assert jnp.allclose(out, ref, atol=tol, rtol=tol)

    # 2) Ragged M (M not a multiple of the tile): exercises the masked edge tile.
    hs_ragged = hidden_states[:, : S - 1, :]
    out_r = jax.block_until_ready(temperature_mechanism(hs_ragged, w_p, b_p, T))
    ref_r = _reference(hs_ragged, weight, bias)
    assert out_r.shape == (B, S - 1, T)
    assert jnp.allclose(out_r, ref_r, atol=tol, rtol=tol)

    print("KERNEL_OK")
</pallas_src>

<mosaic_0001>
module attributes {stable_mosaic.version = 11 : i64} {
  func.func @_temperature_kernel(%arg0: i32, %arg1: memref<16x32xf32, #tpu.memory_space<vmem>>, %arg2: memref<32x128xf32, #tpu.memory_space<vmem>>, %arg3: memref<1x128xf32, #tpu.memory_space<vmem>>, %arg4: memref<16x4xf32, #tpu.memory_space<vmem>>) attributes {dimension_semantics = [#tpu.dimension_semantics<parallel>], iteration_bounds = array<i64: 1>, scalar_prefetch = 0 : i64, scratch_operands = 0 : i64, tpu.core_type = #tpu.core_type<tc>, window_params = [{transform_indices = @transform_0, window_bounds = array<i64: 16, 32>}, {pipeline_mode = #tpu.pipeline_mode<synchronous>, transform_indices = @transform_1, window_bounds = array<i64: 32, 128>}, {pipeline_mode = #tpu.pipeline_mode<synchronous>, transform_indices = @transform_2, window_bounds = array<i64: 1, 128>}, {transform_indices = @transform_3, window_bounds = array<i64: 16, 4>}]} {
    %c0 = arith.constant 0 : index
    %c0_0 = arith.constant 0 : index
    %0 = vector.load %arg1[%c0, %c0_0] : memref<16x32xf32, #tpu.memory_space<vmem>>, vector<16x32xf32>
    %c0_1 = arith.constant 0 : index
    %c0_2 = arith.constant 0 : index
    %1 = vector.load %arg2[%c0_1, %c0_2] : memref<32x128xf32, #tpu.memory_space<vmem>>, vector<32x128xf32>
    %cst = arith.constant dense<0.000000e+00> : vector<16x128xf32>
    %2 = tpu.matmul %0, %1, %cst {dimension_numbers = #tpu.dot_dimension_numbers<[1], [0], [0], [1], [0, 0, 1, 1], [], []>} : vector<16x32xf32>, vector<32x128xf32>, vector<16x128xf32> -> vector<16x128xf32>
    %c0_3 = arith.constant 0 : index
    %c0_4 = arith.constant 0 : index
    %3 = vector.load %arg3[%c0_3, %c0_4] : memref<1x128xf32, #tpu.memory_space<vmem>>, vector<1x128xf32>
    %4 = vector.broadcast %3 : vector<1x128xf32> to vector<16x128xf32>
    %5 = arith.addf %2, %4 : vector<16x128xf32>
    %6 = arith.negf %5 : vector<16x128xf32>
    %7 = math.exp %6 : vector<16x128xf32>
    %cst_5 = arith.constant 1.000000e+00 : f32
    %8 = vector.broadcast %cst_5 : f32 to vector<16x128xf32>
    %9 = arith.addf %8, %7 : vector<16x128xf32>
    %10 = arith.divf %8, %9 : vector<16x128xf32>
    %cst_6 = arith.constant 0.00999999977 : f32
    %cst_7 = arith.constant 9.900000e-01 : f32
    %11 = vector.broadcast %cst_6 : f32 to vector<16x128xf32>
    %12 = arith.maximumf %11, %10 : vector<16x128xf32>
    %13 = vector.broadcast %cst_7 : f32 to vector<16x128xf32>
    %14 = arith.minimumf %13, %12 : vector<16x128xf32>
    %15 = vector.extract_strided_slice %14 {offsets = [0, 0], sizes = [16, 4], strides = [1, 1]} : vector<16x128xf32> to vector<16x4xf32>
    %c0_8 = arith.constant 0 : index
    %c0_9 = arith.constant 0 : index
    %16 = vector.load %arg4[%c0_8, %c0_9] : memref<16x4xf32, #tpu.memory_space<vmem>>, vector<16x4xf32>
    tpu.vector_store %arg4[%c0_8, %c0_9], %15 {strides = array<i32>} : memref<16x4xf32, #tpu.memory_space<vmem>>, vector<16x4xf32>,
    return
  }
  func.func @transform_0(%arg0: i32) -> (i32, i32) {
    %c0_i32 = arith.constant 0 : i32
    %c0_i32_0 = arith.constant 0 : i32
    return %arg0, %c0_i32 : i32, i32
  }
  func.func @transform_1(%arg0: i32) -> (i32, i32) {
    %c0_i32 = arith.constant 0 : i32
    %c0_i32_0 = arith.constant 0 : i32
    %c0_i32_1 = arith.constant 0 : i32
    return %c0_i32, %c0_i32_0 : i32, i32
  }
  func.func @transform_2(%arg0: i32) -> (i32, i32) {
    %c0_i32 = arith.constant 0 : i32
    %c0_i32_0 = arith.constant 0 : i32
    %c0_i32_1 = arith.constant 0 : i32
    return %c0_i32, %c0_i32_0 : i32, i32
  }
  func.func @transform_3(%arg0: i32) -> (i32, i32) {
    %c0_i32 = arith.constant 0 : i32
    %c0_i32_0 = arith.constant 0 : i32
    return %arg0, %c0_i32 : i32, i32
  }
}

</mosaic_0001>

<llo_original>
// kernel: tpu_custom_call.1
$region0: #{tpu_custom_call.1}
  #allocation0 [shape = 'u32[]', space=smem, size = 0x4, offset = 0x4, fixed_abs, tag = 'smem constant byte address 0x4 - core index']
  #allocation1 [shape = 'u32[144,128]{1,0:T(1,128)}', space=vmem, size = 0x12000, scoped, tag = 'internal scratch']
  %s0 = inlined_call_operand.hbm [shape: f32[16,32], index: 0, kind: input, shape index: {}]
  %s1 = inlined_call_operand.hbm [shape: f32[32,128], index: 1, kind: input, shape index: {}]
  %s2 = inlined_call_operand.vmem [shape: f32[1,128], index: 2, kind: input, shape index: {}]
  %s3 = inlined_call_operand.vmem [shape: f32[16,4], index: 3, kind: output, shape index: {}]
  %s4 = sld [smem:[#allocation0]]
  $region30: #{tpu_custom_call.1} parent=0
    _
  %s6 = ssub.s32 1, %s4
  %s7 = scalar_select 0, %s6, %s4
  $region1: #{tpu_custom_call.1} parent=0
    #allocation2 [shape = 'u8[8192]{0}', space=vmem, size = 0x2000, scoped, tag = 'input window, operand 0, single buffered']
    #allocation3 [shape = 's32[1]{0}', space=sflag, size = 0x4, scoped, tag = 'scoped memory for tpu_custom_call.1']
    #allocation4 [shape = 'u8[16384]{0}', space=vmem, size = 0x4000, scoped, tag = 'input window, operand 1, single buffered']
    #allocation5 [shape = 's32[1]{0}', space=sflag, size = 0x4, scoped, tag = 'scoped memory for tpu_custom_call.1']
    %8 = vsyncpa [#allocation3], 0
    %9 = vsyncpa [#allocation5], 0
    // Predicated region
    $region2: #{tpu_custom_call.1} parent=1 // pred_check
      _
    $region3: #{tpu_custom_call.1} parent=1 // pred_check_branch
      %11 = sbr.rel (0) target = $region5
    $region4: #{tpu_custom_call.1} parent=1 // pred_region
      %s13 = ssub.s32 256, 256
      %14 = vsyncadd [#allocation3], %s13
      %s15 = sshll.u32 [#allocation2], 4
      %s16 = int_to_ptr.vmem [resolvable:$true] %s15
      %21 = dma.hbm_to_vmem [thread:$0]  %s0, 256, %s16, [#allocation3], 128, 128, 8
    $region5: #{tpu_custom_call.1} parent=1 // pred_fallthru
      _
    // Predicated region
    $region6: #{tpu_custom_call.1} parent=1 // pred_check
      _
    $region7: #{tpu_custom_call.1} parent=1 // pred_check_branch
      %23 = sbr.rel (0) target = $region9
    $region8: #{tpu_custom_call.1} parent=1 // pred_region
      %s25 = ssub.s32 512, 512
      %26 = vsyncadd [#allocation5], %s25
      %s27 = sshll.u32 [#allocation4], 4
      %s28 = int_to_ptr.vmem [resolvable:$true] %s27
      %33 = dma.hbm_to_vmem [thread:$0]  %s1, 512, %s28, [#allocation5], 128, 128, 8
    $region9: #{tpu_custom_call.1} parent=1 // pred_fallthru
      _
    // Predicated region
    $region10: #{tpu_custom_call.1} parent=1 // pred_check
      _
    $region11: #{tpu_custom_call.1} parent=1 // pred_check_branch
      %35 = sbr.rel (0) target = $region13
    $region12: #{tpu_custom_call.1} parent=1 // pred_region
      _
    $region13: #{tpu_custom_call.1} parent=1 // pred_fallthru
      _
    // Predicated region
    $region14: #{tpu_custom_call.1} parent=1 // pred_check
      _
    $region15: #{tpu_custom_call.1} parent=1 // pred_check_branch
      %37 = sbr.rel (0) target = $region17
    $region16: #{tpu_custom_call.1} parent=1 // pred_region
      %38 = dma.done [#allocation3], 256
    $region17: #{tpu_custom_call.1} parent=1 // pred_fallthru
      _
    // Predicated region
    $region18: #{tpu_custom_call.1} parent=1 // pred_check
      _
    $region19: #{tpu_custom_call.1} parent=1 // pred_check_branch
      %40 = sbr.rel (0) target = $region21
    $region20: #{tpu_custom_call.1} parent=1 // pred_region
      %41 = dma.done [#allocation5], 512
    $region21: #{tpu_custom_call.1} parent=1 // pred_fallthru
      _
    %v42 = vld [vmem:[#allocation2] sm:$0xff]
    %v43 = vld [vmem:[#allocation2 + $0x8] sm:$0xff]
    %v44 = vld [vmem:[#allocation4] sm:$0xff]
    %v45 = vld [vmem:[#allocation4 + $0x8] sm:$0xff]
    %v46 = vld [vmem:[#allocation4 + $0x10] sm:$0xff]
    %v47 = vld [vmem:[#allocation4 + $0x18] sm:$0xff]
    %v48 = vld [vmem:[%s2] sm:$0x1]
    %v50 = vlaneseq
    %v51 = vshrl.u32 %v50, 7
    %v52 = vsub.s32 0, %v51
    %v53 = vrot.slane %v48, %v52
    %vm55 = vcmask 261120
    %v57 = vsel %vm55, %v42, 0
    %v60 = vsel %vm55, %v43, 0
    %62 = vmatprep.subr.mxu0 0.0
    %63 = vmatpush1.msra.mxu0 0.0
    %64 = vmatprep.subr.mxu0 0.0
    %65 = vmatpush1.msra.mxu0 0.0
    %66 = vmatprep.subr.mxu0 0.0
    %67 = vmatpush1.msra.mxu0 0.0
    %68 = vmatprep.subr.mxu0 0.0
    %69 = vmatpush1.msra.mxu0 0.0
    %70 = vmatprep.subr.mxu0 0.0
    %71 = vmatpush1.msra.mxu0 0.0
    %72 = vmatprep.subr.mxu0 0.0
    %73 = vmatpush1.msra.mxu0 0.0
    %74 = vmatprep.subr.mxu0 0.0
    %75 = vmatpush1.msra.mxu0 0.0
    %76 = vmatprep.subr.mxu0 0.0
    %77 = vmatpush1.msra.mxu0 0.0
    %78 = vmatprep.subr.mxu0 0.0
    %79 = vmatpush1.msra.mxu0 0.0
    %80 = vmatprep.subr.mxu0 0.0
    %81 = vmatpush1.msra.mxu0 0.0
    %82 = vmatprep.subr.mxu0 0.0
    %83 = vmatpush1.msra.mxu0 0.0
    %84 = vmatprep.subr.mxu0 0.0
    %85 = vmatpush1.msra.mxu0 0.0
    %86 = vmatprep.subr.mxu0 0.0
    %87 = vmatpush1.msra.mxu0 %v47
    %88 = vmatprep.subr.mxu0 0.0
    %89 = vmatpush1.msra.mxu0 %v46
    %90 = vmatprep.subr.mxu0 0.0
    %91 = vmatpush1.msra.mxu0 %v45
    %92 = vmatprep.subr.mxu0 0.0
    %93 = vmatpush1.msra.mxu0 %v44
    %94 = vmatprep.subr.mxu0 0.0
    %95 = vmatpush2.msra.mxu0 0.0
    %96 = vmatprep.subr.mxu0 0.0
    %97 = vmatpush2.msra.mxu0 0.0
    %98 = vmatprep.subr.mxu0 0.0
    %99 = vmatpush2.msra.mxu0 0.0
    %100 = vmatprep.subr.mxu0 0.0
    %101 = vmatpush2.msra.mxu0 0.0
    %102 = vmatprep.subr.mxu0 0.0
    %103 = vmatpush2.msra.mxu0 0.0
    %104 = vmatprep.subr.mxu0 0.0
    %105 = vmatpush2.msra.mxu0 0.0
    %106 = vmatprep.subr.mxu0 0.0
    %107 = vmatpush2.msra.mxu0 0.0
    %108 = vmatprep.subr.mxu0 0.0
    %109 = vmatpush2.msra.mxu0 0.0
    %110 = vmatprep.subr.mxu0 0.0
    %111 = vmatpush2.msra.mxu0 0.0
    %112 = vmatprep.subr.mxu0 0.0
    %113 = vmatpush2.msra.mxu0 0.0
    %114 = vmatprep.subr.mxu0 0.0
    %115 = vmatpush2.msra.mxu0 0.0
    %116 = vmatprep.subr.mxu0 0.0
    %117 = vmatpush2.msra.mxu0 0.0
    %118 = vmatprep.subr.mxu0 0.0
    %119 = vmatpush2.msra.mxu0 0.0
    %120 = vmatprep.subr.mxu0 0.0
    %121 = vmatpush2.msra.mxu0 0.0
    %122 = vmatprep.subr.mxu0 0.0
    %123 = vmatpush2.msra.mxu0 0.0
    %124 = vmatprep.subr.mxu0 0.0
    %125 = vmatpush2.msra.mxu0 0.0
    %126 = vmatprep.mubr.f32.mxu0 0.0
    %127 = vmatmul.mubr.f32.gmra.mxu0 %v57
    %v128 = vpop.f32.mrf.mxu0
    %v129 = vadd.f32 %v53, %v128
    %v130 = vpop.f32.mrf.mxu0
    %131 = vmatprep.mubr.f32.mxu0 0.0
    %132 = vmatmul.mubr.f32.gmra.mxu0 %v60
    %v133 = vpop.f32.mrf.mxu0
    %v134 = vadd.f32 %v53, %v133
    %v135 = vpop.f32.mrf.mxu0
    %136 = vdwg.mxu0
    %v137 = vxor.u32 %v129, 2147483648
    %v138 = vxor.u32 %v134, 2147483648
    %v139 = vmul.f32 %v137, 1.442695
    %v140 = vpow.pop %v139
    %v141 = vmul.f32 %v138, 1.442695
    %v142 = vpow.pop %v141
    %v143 = vadd.f32 %v140, 1.0
    %v144 = vadd.f32 %v142, 1.0
    %v145 = vrcp.pop %v143
    %v146 = vmul.f32 1.0, %v145
    %v147 = vrcp.pop %v144
    %v148 = vmul.f32 1.0, %v147
    %v149 = vmax.f32 %v146, 0.01
    %v150 = vmax.f32 %v148, 0.01
    %v151 = vmin.f32 %v149, 0.99
    %v152 = vmin.f32 %v150, 0.99
    %vm153 = vcmask 31744
    %154 = vst.msk [vmem:[%s3] sm:$0xff] %vm153, %v151
    %155 = vst.msk [vmem:[%s3 + $0x8] sm:$0xff] %vm153, %v152
    // Predicated region
    $region22: #{tpu_custom_call.1} parent=1 // pred_check
      _
    $region23: #{tpu_custom_call.1} parent=1 // pred_check_branch
      %157 = sbr.rel (0) target = $region25
    $region24: #{tpu_custom_call.1} parent=1 // pred_region
      _
    $region25: #{tpu_custom_call.1} parent=1 // pred_fallthru
      _
    // Predicated region
    $region26: #{tpu_custom_call.1} parent=1 // pred_check
      _
    $region27: #{tpu_custom_call.1} parent=1 // pred_check_branch
      %159 = sbr.rel (0) target = $region29
    $region28: #{tpu_custom_call.1} parent=1 // pred_region
      _
    $region29: #{tpu_custom_call.1} parent=1 // pred_fallthru
      _
    %160 = vsyncpa [#allocation3], 1
    %161 = vsyncpa [#allocation5], 1

</llo_original>
